<compile_context>
chip_gen: v5e
topology: v5e:2x2
jax: 0.10.0
libtpu: 0.0.40
codegen_flags: <defaults>
</compile_context>

<pallas_src>
import functools

import jax
import jax.numpy as jnp
from jax import lax
from jax.experimental import pallas as pl
from jax.experimental.pallas import tpu as pltpu


def _round_up(a, b):
    return ((a + b - 1) // b) * b


def _cdiv(a, b):
    return (a + b - 1) // b


def _vmem_config():
    """Per-generation (tile-footprint budget, scoped vmem limit, is_small_vmem)."""
    try:
        cap = pltpu.get_tpu_info().vmem_capacity_bytes
    except Exception:
        cap = 64 * 1024 * 1024  # be conservative (v7x-sized) if the query fails
    if cap >= 128 * 1024 * 1024:        # v5e / v6e: 128 MiB physical VMEM
        return 80 * 1024 * 1024, 100 * 1024 * 1024, False
    else:                               # v7x: 64 MiB per TensorCore
        return 24 * 1024 * 1024, 32 * 1024 * 1024, True


def _fullk_kernel(x_ref, w_ref, o_ref):
    # One full-K contraction per (tm, tn) output tile, fused ReLU.
    # Weight stays in PyTorch's (out_dims, in_dims) layout: contract dim 1 of both.
    y = lax.dot_general(
        x_ref[...], w_ref[...],
        dimension_numbers=(((1,), (1,)), ((), ())),
        preferred_element_type=jnp.float32,
    )
    o_ref[...] = jnp.maximum(y, 0.0).astype(o_ref.dtype)


def _ksplit_kernel(x_ref, w_ref, o_ref, acc_ref):
    # Large-in_dims path: K grid axis with f32 accumulator scratch.
    @pl.when(pl.program_id(2) == 0)
    def _():
        acc_ref[...] = jnp.zeros_like(acc_ref)

    acc_ref[...] += lax.dot_general(
        x_ref[...], w_ref[...],
        dimension_numbers=(((1,), (1,)), ((), ())),
        preferred_element_type=jnp.float32,
    )

    @pl.when(pl.program_id(2) == pl.num_programs(2) - 1)
    def _():
        o_ref[...] = jnp.maximum(acc_ref[...], 0.0).astype(o_ref.dtype)


@functools.partial(jax.jit, static_argnames=("use_pallas",))
def merger_forward(x, w, *, use_pallas=None):
    """relu(x @ w.T).

    x: (B, in_dims) activations.
    w: (out_dims, in_dims) weight in PyTorch nn.Linear layout (bias-free, untouched).
    Returns (B, out_dims).
    """
    M, K = x.shape
    N, K2 = w.shape
    assert K == K2, "weight in_dims must match x"

    # Small-problem fallback: fixed pallas_call overhead dominates, let XLA fuse.
    if use_pallas is None:
        use_pallas = (M * K * N) >= (1 << 20)
    if not use_pallas:
        return jnp.maximum(x @ w.T, 0.0)

    x_item = jnp.dtype(x.dtype).itemsize
    w_item = jnp.dtype(w.dtype).itemsize
    o_item = jnp.dtype(x.dtype).itemsize

    tile_budget, vmem_limit, is_small_vmem = _vmem_config()

    def footprint(tm, tn, tk):
        # double-buffered inputs + double-buffered output tile
        return 2 * (tm * tk * x_item + tn * tk * w_item + tm * tn * o_item)

    # ---- static tile selection (shapes are compile-time constants) ----
    if M <= 256:
        tm_cands = (M,)
    else:
        m_cap = min(512, _round_up(M, 128))
        tm_cands = tuple(t for t in (512, 384, 256, 128) if t <= m_cap)
    tm_min = tm_cands[-1]

    n_cap = _round_up(N, 128)
    tn_cands = tuple(t for t in (512, 384, 256, 128) if t <= n_cap)

    # Widest lane-dense tn that fits the full-K budget (no divisibility requirement).
    tn = None
    for cand in tn_cands:
        if footprint(tm_min, cand, K) <= tile_budget:
            tn = cand
            break

    if tn is not None:
        # ---------------- full-K path: one dot per output tile ----------------
        tm = tm_min
        for cand in tm_cands:
            if footprint(cand, tn, K) <= tile_budget:
                tm = cand
                break

        # v7x has 2 TensorCores: avoid parking one on a (1,1) grid when the problem
        # is big enough to be worth splitting.
        if (is_small_vmem and _cdiv(M, tm) * _cdiv(N, tn) == 1
                and M * N >= 128 * 256):
            if N > 128:
                tn = max(128, _round_up(_cdiv(N, 2), 128))
            elif M > 8:
                tm = max(8, _round_up(_cdiv(M, 2), 8))

        # Single-tile axes collapse to the exact extent (full-dim block, no masking).
        if _cdiv(N, tn) == 1:
            tn = N
        if _cdiv(M, tm) == 1:
            tm = M

        m_tiles = _cdiv(M, tm)
        n_tiles = _cdiv(N, tn)

        # Put the axis with the *larger* tile outermost: that operand is fetched once,
        # only the smaller operand is re-streamed from HBM across the inner axis.
        m_inner = (tn > tm) and (m_tiles > 1) and (n_tiles > 1)
        if m_inner:
            grid = (n_tiles, m_tiles)
            x_spec = pl.BlockSpec((tm, K), lambda j, i: (i, 0))
            w_spec = pl.BlockSpec((tn, K), lambda j, i: (j, 0))
            o_spec = pl.BlockSpec((tm, tn), lambda j, i: (i, j))
        else:
            grid = (m_tiles, n_tiles)
            x_spec = pl.BlockSpec((tm, K), lambda i, j: (i, 0))
            w_spec = pl.BlockSpec((tn, K), lambda i, j: (j, 0))
            o_spec = pl.BlockSpec((tm, tn), lambda i, j: (i, j))

        return pl.pallas_call(
            _fullk_kernel,
            out_shape=jax.ShapeDtypeStruct((M, N), x.dtype),
            grid=grid,
            in_specs=[x_spec, w_spec],
            out_specs=o_spec,
            compiler_params=pltpu.CompilerParams(
                dimension_semantics=("parallel", "parallel"),
                vmem_limit_bytes=vmem_limit,
            ),
        )(x, w)

    # ---------------- K-split fallback: full-K tile does not fit VMEM ----------------
    tm = M if M <= 256 else 128
    tn = 128
    tk = 128
    for cand in (2048, 1024, 512, 256, 128):
        if footprint(tm, tn, cand) <= tile_budget:
            tk = cand
            break

    Kp = _round_up(K, tk)
    if Kp != K:
        # Zero padding along the contraction is exact (contributes 0 to every sum).
        x = jnp.pad(x, ((0, 0), (0, Kp - K)))
        w = jnp.pad(w, ((0, 0), (0, Kp - K)))

    grid = (_cdiv(M, tm), _cdiv(N, tn), Kp // tk)
    return pl.pallas_call(
        _ksplit_kernel,
        out_shape=jax.ShapeDtypeStruct((M, N), x.dtype),
        grid=grid,
        in_specs=[
            pl.BlockSpec((tm, tk), lambda i, j, k: (i, k)),
            pl.BlockSpec((tn, tk), lambda i, j, k: (j, k)),
        ],
        out_specs=pl.BlockSpec((tm, tn), lambda i, j, k: (i, j)),
        scratch_shapes=[pltpu.VMEM((tm, tn), jnp.float32)],
        compiler_params=pltpu.CompilerParams(
            dimension_semantics=("parallel", "parallel", "arbitrary"),
            vmem_limit_bytes=vmem_limit,
        ),
    )(x, w)


if __name__ == "__main__":
    key = jax.random.PRNGKey(0)
    kx, kw, kx2, kw2 = jax.random.split(key, 4)

    # Small shapes consistent with Merger(in_dims, out_dims); out_dims not a multiple
    # of 128 so the non-128-aligned (full-dim block) path is exercised.
    batch, in_dims, out_dims = 8, 96, 200
    x = jax.random.normal(kx, (batch, in_dims), dtype=jnp.float32)
    bound = 1.0 / (in_dims ** 0.5)
    w = jax.random.uniform(kw, (out_dims, in_dims), dtype=jnp.float32,
                           minval=-bound, maxval=bound)

    out = merger_forward(x, w, use_pallas=True)   # force the Pallas path at demo size
    jax.block_until_ready(out)
    ref = jnp.maximum(x @ w.T, 0.0)
    assert out.shape == (batch, out_dims)
    assert jnp.allclose(out, ref, atol=2e-5, rtol=2e-5)

    # Second small check: out_dims > 512 exercises multi-tile N with a masked last tile.
    b2, k2, n2 = 16, 128, 520
    x2 = jax.random.normal(kx2, (b2, k2), dtype=jnp.float32)
    bound2 = 1.0 / (k2 ** 0.5)
    w2 = jax.random.uniform(kw2, (n2, k2), dtype=jnp.float32,
                            minval=-bound2, maxval=bound2)
    out2 = merger_forward(x2, w2, use_pallas=True)
    jax.block_until_ready(out2)
    ref2 = jnp.maximum(x2 @ w2.T, 0.0)
    assert out2.shape == (b2, n2)
    assert jnp.allclose(out2, ref2, atol=2e-5, rtol=2e-5)

    # Auto path (small-problem fused-XLA fallback) — semantics must match too.
    out3 = merger_forward(x, w)
    jax.block_until_ready(out3)
    assert jnp.allclose(out3, ref, atol=2e-5, rtol=2e-5)

    print("KERNEL_OK")
</pallas_src>

<mosaic_0001>
module attributes {stable_mosaic.version = 11 : i64} {
  func.func @_fullk_kernel(%arg0: i32, %arg1: i32, %arg2: memref<8x96xf32, #tpu.memory_space<vmem>>, %arg3: memref<200x96xf32, #tpu.memory_space<vmem>>, %arg4: memref<8x200xf32, #tpu.memory_space<vmem>>) attributes {dimension_semantics = [#tpu.dimension_semantics<parallel>, #tpu.dimension_semantics<parallel>], iteration_bounds = array<i64: 1, 1>, scalar_prefetch = 0 : i64, scratch_operands = 0 : i64, tpu.core_type = #tpu.core_type<tc>, window_params = [{transform_indices = @transform_0, window_bounds = array<i64: 8, 96>}, {transform_indices = @transform_1, window_bounds = array<i64: 200, 96>}, {transform_indices = @transform_2, window_bounds = array<i64: 8, 200>}]} {
    %c0 = arith.constant 0 : index
    %c0_0 = arith.constant 0 : index
    %0 = vector.load %arg2[%c0, %c0_0] : memref<8x96xf32, #tpu.memory_space<vmem>>, vector<8x96xf32>
    %c0_1 = arith.constant 0 : index
    %c0_2 = arith.constant 0 : index
    %1 = vector.load %arg3[%c0_1, %c0_2] : memref<200x96xf32, #tpu.memory_space<vmem>>, vector<200x96xf32>
    %cst = arith.constant dense<0.000000e+00> : vector<8x200xf32>
    %2 = tpu.matmul %0, %1, %cst {dimension_numbers = #tpu.dot_dimension_numbers<[1], [1], [0], [0], [0, 0, 1, 0], [], []>} : vector<8x96xf32>, vector<200x96xf32>, vector<8x200xf32> -> vector<8x200xf32>
    %cst_3 = arith.constant 0.000000e+00 : f32
    %3 = vector.broadcast %cst_3 : f32 to vector<8x200xf32>
    %4 = arith.maximumf %2, %3 : vector<8x200xf32>
    %c0_4 = arith.constant 0 : index
    %c0_5 = arith.constant 0 : index
    %5 = vector.load %arg4[%c0_4, %c0_5] : memref<8x200xf32, #tpu.memory_space<vmem>>, vector<8x200xf32>
    tpu.vector_store %arg4[%c0_4, %c0_5], %4 {strides = array<i32>} : memref<8x200xf32, #tpu.memory_space<vmem>>, vector<8x200xf32>,
    return
  }
  func.func @transform_0(%arg0: i32, %arg1: i32) -> (i32, i32) {
    %c0_i32 = arith.constant 0 : i32
    %c0_i32_0 = arith.constant 0 : i32
    return %arg0, %c0_i32 : i32, i32
  }
  func.func @transform_1(%arg0: i32, %arg1: i32) -> (i32, i32) {
    %c0_i32 = arith.constant 0 : i32
    %c0_i32_0 = arith.constant 0 : i32
    return %arg1, %c0_i32 : i32, i32
  }
  func.func @transform_2(%arg0: i32, %arg1: i32) -> (i32, i32) {
    %c0_i32 = arith.constant 0 : i32
    return %arg0, %arg1 : i32, i32
  }
}

</mosaic_0001>

<llo_original>
// kernel: merger_forward.1
$region0: #{merger_forward.1}
  #allocation0 [shape = 'u32[]', space=smem, size = 0x4, offset = 0x4, fixed_abs, tag = 'smem constant byte address 0x4 - core index']
  #allocation1 [shape = 'u32[72,128]{1,0:T(1,128)}', space=vmem, size = 0x9000, scoped, tag = 'internal scratch']
  %s0 = inlined_call_operand.vmem [shape: f32[8,96], index: 0, kind: input, shape index: {}]
  %s1 = inlined_call_operand.vmem [shape: f32[200,96], index: 1, kind: input, shape index: {}]
  %s2 = inlined_call_operand.hbm [shape: f32[8,200], index: 2, kind: output, shape index: {}]
  %s3 = sld [smem:[#allocation0]]
  $region18: #{merger_forward.1} parent=0
    _
  %s5 = ssub.s32 1, %s3
  %s6 = scalar_select 0, %s5, %s3
  $region1: #{merger_forward.1} parent=0
    #allocation2 [shape = 'u8[8192]{0}', space=vmem, size = 0x2000, scoped, tag = 'output window, operand 0, single buffered']
    #allocation3 [shape = 's32[1]{0}', space=sflag, size = 0x4, scoped, tag = 'scoped memory for merger_forward.1']
    %7 = vsyncpa [#allocation3], 0
    // Predicated region
    $region2: #{merger_forward.1} parent=1 // pred_check
      _
    $region3: #{merger_forward.1} parent=1 // pred_check_branch
      %9 = sbr.rel (0) target = $region5
    $region4: #{merger_forward.1} parent=1 // pred_region
      _
    $region5: #{merger_forward.1} parent=1 // pred_fallthru
      _
    // Predicated region
    $region6: #{merger_forward.1} parent=1 // pred_check
      _
    $region7: #{merger_forward.1} parent=1 // pred_check_branch
      %11 = sbr.rel (0) target = $region9
    $region8: #{merger_forward.1} parent=1 // pred_region
      _
    $region9: #{merger_forward.1} parent=1 // pred_fallthru
      _
    %v12 = vld [vmem:[%s0] sm:$0xff]
    %v13 = vld [vmem:[%s1] sm:$0xff]
    %v14 = vld [vmem:[%s1 + $0x8] sm:$0xff]
    %v15 = vld [vmem:[%s1 + $0x10] sm:$0xff]
    %v16 = vld [vmem:[%s1 + $0x18] sm:$0xff]
    %v17 = vld [vmem:[%s1 + $0x20] sm:$0xff]
    %v18 = vld [vmem:[%s1 + $0x28] sm:$0xff]
    %v19 = vld [vmem:[%s1 + $0x30] sm:$0xff]
    %v20 = vld [vmem:[%s1 + $0x38] sm:$0xff]
    %v21 = vld [vmem:[%s1 + $0x40] sm:$0xff]
    %v22 = vld [vmem:[%s1 + $0x48] sm:$0xff]
    %v23 = vld [vmem:[%s1 + $0x50] sm:$0xff]
    %v24 = vld [vmem:[%s1 + $0x58] sm:$0xff]
    %v25 = vld [vmem:[%s1 + $0x60] sm:$0xff]
    %v26 = vld [vmem:[%s1 + $0x68] sm:$0xff]
    %v27 = vld [vmem:[%s1 + $0x70] sm:$0xff]
    %v28 = vld [vmem:[%s1 + $0x78] sm:$0xff]
    %v29 = vld [vmem:[%s1 + $0x80] sm:$0xff]
    %v30 = vld [vmem:[%s1 + $0x88] sm:$0xff]
    %v31 = vld [vmem:[%s1 + $0x90] sm:$0xff]
    %v32 = vld [vmem:[%s1 + $0x98] sm:$0xff]
    %v33 = vld [vmem:[%s1 + $0xa0] sm:$0xff]
    %v34 = vld [vmem:[%s1 + $0xa8] sm:$0xff]
    %v35 = vld [vmem:[%s1 + $0xb0] sm:$0xff]
    %v36 = vld [vmem:[%s1 + $0xb8] sm:$0xff]
    %v37 = vld [vmem:[%s1 + $0xc0] sm:$0xff]
    %vm38 = vcmask 785408
    %v40 = vsel %vm38, %v12, 0
    %v43 = vsel %vm38, %v13, 0
    %v46 = vsel %vm38, %v14, 0
    %v49 = vsel %vm38, %v15, 0
    %v52 = vsel %vm38, %v16, 0
    %v55 = vsel %vm38, %v17, 0
    %v58 = vsel %vm38, %v18, 0
    %v61 = vsel %vm38, %v19, 0
    %v64 = vsel %vm38, %v20, 0
    %v67 = vsel %vm38, %v21, 0
    %v70 = vsel %vm38, %v22, 0
    %v73 = vsel %vm38, %v23, 0
    %v76 = vsel %vm38, %v24, 0
    %v79 = vsel %vm38, %v25, 0
    %v82 = vsel %vm38, %v26, 0
    %v85 = vsel %vm38, %v27, 0
    %v88 = vsel %vm38, %v28, 0
    %v91 = vsel %vm38, %v29, 0
    %v94 = vsel %vm38, %v30, 0
    %v97 = vsel %vm38, %v31, 0
    %v100 = vsel %vm38, %v32, 0
    %v103 = vsel %vm38, %v33, 0
    %v106 = vsel %vm38, %v34, 0
    %v109 = vsel %vm38, %v35, 0
    %v112 = vsel %vm38, %v36, 0
    %v115 = vsel %vm38, %v37, 0
    %117 = vmatpush.xpose.msra.mxu0 %v88
    %118 = vmatpush.xpose.msra.mxu0 %v85
    %119 = vmatpush.xpose.msra.mxu0 %v82
    %120 = vmatpush.xpose.msra.mxu0 %v79
    %121 = vmatpush.xpose.msra.mxu0 %v76
    %122 = vmatpush.xpose.msra.mxu0 %v73
    %123 = vmatpush.xpose.msra.mxu0 %v70
    %124 = vmatpush.xpose.msra.mxu0 %v67
    %125 = vmatpush.xpose.msra.mxu0 %v64
    %126 = vmatpush.xpose.msra.mxu0 %v61
    %127 = vmatpush.xpose.msra.mxu0 %v58
    %128 = vmatpush.xpose.msra.mxu0 %v55
    %129 = vmatpush.xpose.msra.mxu0 %v52
    %130 = vmatpush.xpose.msra.mxu0 %v49
    %131 = vmatpush.xpose.msra.mxu0 %v46
    %132 = vmatpush.xpose.msra.mxu0 %v43
    %133 = vmatmul.f32.gmra.mxu0 %v40
    %v134 = vpop.f32.mrf.mxu0
    %v135 = vadd.f32 0.0, %v134
    %136 = vdwg.mxu0
    %137 = vmatpush.xpose.msra.mxu0 0.0
    %138 = vmatpush.xpose.msra.mxu0 0.0
    %139 = vmatpush.xpose.msra.mxu0 0.0
    %140 = vmatpush.xpose.msra.mxu0 0.0
    %141 = vmatpush.xpose.msra.mxu0 0.0
    %142 = vmatpush.xpose.msra.mxu0 0.0
    %143 = vmatpush.xpose.msra.mxu0 0.0
    %144 = vmatpush.xpose.msra.mxu0 %v115
    %145 = vmatpush.xpose.msra.mxu0 %v112
    %146 = vmatpush.xpose.msra.mxu0 %v109
    %147 = vmatpush.xpose.msra.mxu0 %v106
    %148 = vmatpush.xpose.msra.mxu0 %v103
    %149 = vmatpush.xpose.msra.mxu0 %v100
    %150 = vmatpush.xpose.msra.mxu0 %v97
    %151 = vmatpush.xpose.msra.mxu0 %v94
    %152 = vmatpush.xpose.msra.mxu0 %v91
    %153 = vmatmul.f32.gmra.mxu0 %v40
    %v154 = vpop.f32.mrf.mxu0
    %v155 = vadd.f32 0.0, %v154
    %156 = vdwg.mxu0
    %v157 = vmax.f32 %v135, 0.0
    %v158 = vmax.f32 %v155, 0.0
    %159 = vst [vmem:[#allocation2] sm:$0xff] %v157
    %vm160 = vcmask 588800
    %161 = vst.msk [vmem:[#allocation2 + $0x8] sm:$0xff] %vm160, %v158
    // Predicated region
    $region10: #{merger_forward.1} parent=1 // pred_check
      _
    $region11: #{merger_forward.1} parent=1 // pred_check_branch
      %163 = sbr.rel (0) target = $region13
    $region12: #{merger_forward.1} parent=1 // pred_region
      %165 = vsyncadd [#allocation3], 0
      %s167 = sshll.u32 [#allocation2], 4
      %s168 = int_to_ptr.vmem [resolvable:$true] %s167
      %s169 = sshll.u32 %s2, 4
      %s170 = int_to_ptr.hbm [resolvable:$true] %s169
      %172 = dma.vmem_to_hbm [thread:$0]  %s168, 256, %s170, [#allocation3]
    $region13: #{merger_forward.1} parent=1 // pred_fallthru
      _
    // Predicated region
    $region14: #{merger_forward.1} parent=1 // pred_check
      _
    $region15: #{merger_forward.1} parent=1 // pred_check_branch
      %174 = sbr.rel (0) target = $region17
    $region16: #{merger_forward.1} parent=1 // pred_region
      %176 = dma.done [#allocation3], 256
    $region17: #{merger_forward.1} parent=1 // pred_fallthru
      _
    %177 = vsyncpa [#allocation3], 1

</llo_original>
